<compile_context>
chip_gen: v6e
topology: v6e:2x2x1
jax: 0.10.0
libtpu: 0.0.40
codegen_flags: <defaults>
</compile_context>

<pallas_src>
import functools

import jax
import jax.numpy as jnp
from jax.experimental import pallas as pl
from jax.experimental.pallas import tpu as pltpu


def _vmem_limit_bytes():
    """Scoped VMEM limit: real capacity minus headroom for Mosaic scratch."""
    try:
        cap = int(pltpu.get_tpu_info().vmem_capacity_bytes)
    except Exception:
        cap = 64 * 1024 * 1024          # conservative fallback (safe on all gens)
    # ~56 MiB on 64 MiB (v7x) parts, ~100 MiB on 128 MiB (v5e/v6e) parts.
    return max(min(cap - 8 * 1024 * 1024, 100 * 1024 * 1024), 16 * 1024 * 1024)


def _choose_batch_block(B, I, H, state_bytes, vmem_limit):
    """Largest sublane-aligned batch block whose live VMEM fits the budget."""
    # Grid-invariant weights (double-buffered by the default pipeline).
    weight_bytes = 2 * 4 * (I * 6 * H + H * 3 * H + 6 * H)
    # Per batch row:
    #   C-in + C_new-out tiles, double-buffered        -> 4 * H*H * state_bytes
    #   fp32 in-kernel temporaries (~3 live HxH slabs) -> 12 * H*H
    #   x / h / h_out tiles (double-buffered)          -> small
    per_row = 4 * H * H * state_bytes + 12 * H * H + 8 * (I + 2 * H)
    budget = max(vmem_limit - weight_bytes - 4 * 1024 * 1024, per_row)
    tb = int(budget // per_row)
    # Keep >= 2 grid steps for large batches so both v7x TensorCores get work.
    if B >= 16:
        half = -(-B // 2)
        tb = min(tb, -(-half // 8) * 8)
    tb = min(tb, B)
    if tb >= B:
        return B                                # single full-extent block
    tb = max(8, (tb // 8) * 8)                  # sublane-aligned partial blocks
    return min(tb, B)


def _mlstm_kernel(x_ref, h_ref, c_ref,
                  w_fused_ref, b_fused_ref, whh_ref,
                  h_out_ref, c_out_ref, *, hidden_size):
    H = hidden_size
    x = x_ref[...]                               # (TB, I)  fp32
    h = h_ref[...]                               # (TB, H)  fp32
    C = c_ref[...].astype(jnp.float32)           # (TB, H, H) upcast (bf16 streaming)

    # One fused matmul for [gates_ih | q | k | v] -> (TB, 6H), plus one matmul
    # for the recurrent gate contribution -> (TB, 3H).
    proj = (jnp.dot(x, w_fused_ref[...], preferred_element_type=jnp.float32)
            + b_fused_ref[...])                                        # (TB, 6H)
    gates = proj[:, :3 * H] + jnp.dot(
        h, whh_ref[...], preferred_element_type=jnp.float32)           # (TB, 3H)

    i_g = jnp.exp(gates[:, 0 * H:1 * H])           # exponential input gate
    f_g = jnp.exp(gates[:, 1 * H:2 * H])           # exponential forget gate
    o_g = jax.nn.sigmoid(gates[:, 2 * H:3 * H])    # output gate

    q = proj[:, 3 * H:4 * H]
    k = proj[:, 4 * H:5 * H]
    v = proj[:, 5 * H:6 * H]

    # Decayed state (reused by both the state update and the readout).
    t = f_g[:, :, None] * C                                            # (TB,H,H)
    C_new = t + (i_g * v)[:, :, None] * k[:, None, :]                  # (TB,H,H)
    c_out_ref[...] = C_new.astype(c_out_ref.dtype)   # start writeback early

    # Readout: sum_m q*C_new == sum_m q*t + (sum_m q*i*v) * k
    qt = jnp.sum(q[:, :, None] * t, axis=1)                            # (TB,H)
    qiv = jnp.sum(q * i_g * v, axis=1, keepdims=True)                  # (TB,1)
    h_out_ref[...] = (o_g * (qt + qiv * k)).astype(h_out_ref.dtype)


def mlstm_cell_forward(x, h, C, params):
    """x: (B,I) fp32, h: (B,H) fp32, C: (B,H,H) fp32 or bf16 (streamed as-is).

    Returns (h_new (B,H) fp32, C_new (B,H,H) same dtype as C).
    """
    B, I = x.shape
    H = h.shape[1]
    state_dtype = C.dtype
    state_bytes = jnp.dtype(state_dtype).itemsize

    vmem_limit = _vmem_limit_bytes()
    TB = _choose_batch_block(B, I, H, state_bytes, vmem_limit)
    n_blocks = -(-B // TB)

    # Fuse the five input projections: [W_ih^T | W_q^T | W_k^T | W_v^T] -> (I, 6H).
    w_fused = jnp.concatenate(
        [params["weight_ih"].T, params["W_q_w"].T,
         params["W_k_w"].T, params["W_v_w"].T], axis=1).astype(jnp.float32)
    b_fused = jnp.concatenate(
        [params["bias"], params["W_q_b"], params["W_k_b"],
         params["W_v_b"]]).reshape(1, 6 * H).astype(jnp.float32)
    whh_t = params["weight_hh"].T.astype(jnp.float32)

    flops = int(2 * B * (I * 6 * H + H * 3 * H) + 9 * B * H * H)
    bytes_accessed = int(state_bytes * 2 * B * H * H
                         + 4 * (B * I + 3 * B * H)
                         + 4 * (I * 6 * H + H * 3 * H + 6 * H))
    cost = pl.CostEstimate(flops=flops, transcendentals=int(3 * B * H),
                           bytes_accessed=bytes_accessed)

    kernel = functools.partial(_mlstm_kernel, hidden_size=H)

    per_block2 = lambda b: (b, 0)
    per_block3 = lambda b: (b, 0, 0)
    whole = lambda b: (0, 0)

    h_new, c_new = pl.pallas_call(
        kernel,
        out_shape=(
            jax.ShapeDtypeStruct((B, H), jnp.float32),
            jax.ShapeDtypeStruct((B, H, H), state_dtype),
        ),
        grid_spec=pltpu.PrefetchScalarGridSpec(
            num_scalar_prefetch=0,
            grid=(n_blocks,),
            in_specs=[
                pl.BlockSpec((TB, I), per_block2),        # x
                pl.BlockSpec((TB, H), per_block2),        # h
                pl.BlockSpec((TB, H, H), per_block3),     # C (streamed dtype)
                pl.BlockSpec((I, 6 * H), whole),          # fused [Wih|Wq|Wk|Wv]^T
                pl.BlockSpec((1, 6 * H), whole),          # fused bias
                pl.BlockSpec((H, 3 * H), whole),          # W_hh^T
            ],
            out_specs=(
                pl.BlockSpec((TB, H), per_block2),        # h_new
                pl.BlockSpec((TB, H, H), per_block3),     # C_new
            ),
        ),
        # Destructive state update: reuse C's HBM buffer for C_new.
        input_output_aliases={2: 1},
        compiler_params=pltpu.CompilerParams(
            dimension_semantics=("parallel",),
            vmem_limit_bytes=int(vmem_limit)),
        cost_estimate=cost,
    )(x, h, C, w_fused, b_fused, whh_t)

    return h_new, c_new


def _xavier_uniform(key, shape):
    fan_out, fan_in = shape
    limit = jnp.sqrt(6.0 / (fan_in + fan_out))
    return jax.random.uniform(key, shape, jnp.float32, -limit, limit)


def init_params(key, input_size, hidden_size):
    ks = jax.random.split(key, 5)
    return {
        "weight_ih": _xavier_uniform(ks[0], (3 * hidden_size, input_size)),
        "weight_hh": _xavier_uniform(ks[1], (3 * hidden_size, hidden_size)),
        "bias": jnp.zeros((3 * hidden_size,), jnp.float32),
        "W_q_w": _xavier_uniform(ks[2], (hidden_size, input_size)),
        "W_k_w": _xavier_uniform(ks[3], (hidden_size, input_size)),
        "W_v_w": _xavier_uniform(ks[4], (hidden_size, input_size)),
        "W_q_b": jnp.zeros((hidden_size,), jnp.float32),
        "W_k_b": jnp.zeros((hidden_size,), jnp.float32),
        "W_v_b": jnp.zeros((hidden_size,), jnp.float32),
    }


def mlstm_cell_reference(x, h, C, p):
    """Plain-JAX reference mirroring the PyTorch forward, for verification."""
    gates = x @ p["weight_ih"].T + p["bias"] + h @ p["weight_hh"].T
    H = h.shape[1]
    i = jnp.exp(gates[:, :H])
    f = jnp.exp(gates[:, H:2 * H])
    o = jax.nn.sigmoid(gates[:, 2 * H:])
    q = x @ p["W_q_w"].T + p["W_q_b"]
    k = x @ p["W_k_w"].T + p["W_k_b"]
    v = x @ p["W_v_w"].T + p["W_v_b"]
    C_new = f[:, :, None] * C + i[:, :, None] * (v[:, :, None] * k[:, None, :])
    h_new = o * jnp.einsum("bm,bmn->bn", q, C_new)
    return h_new, C_new


if __name__ == "__main__":
    B, I, H = 2, 32, 32

    key = jax.random.PRNGKey(0)
    k_param, k_x, k_h, k_c = jax.random.split(key, 4)

    params = init_params(k_param, I, H)
    x = jax.random.normal(k_x, (B, I), jnp.float32)
    h0 = jax.random.normal(k_h, (B, H), jnp.float32)
    C0 = jax.random.normal(k_c, (B, H, H), jnp.float32)

    # fp32 matrix state: exact check against the plain-JAX reference.
    h_new, C_new = mlstm_cell_forward(x, h0, C0, params)
    jax.block_until_ready((h_new, C_new))
    h_ref, C_ref = mlstm_cell_reference(x, h0, C0, params)
    assert jnp.allclose(h_new, h_ref, atol=1e-4, rtol=1e-4), "h mismatch (fp32)"
    assert jnp.allclose(C_new, C_ref, atol=1e-4, rtol=1e-4), "C mismatch (fp32)"

    # bf16 matrix-state streaming (the HBM-bandwidth optimization): loose check.
    C0_bf16 = C0.astype(jnp.bfloat16)
    h_bf, C_bf = mlstm_cell_forward(x, h0, C0_bf16, params)
    jax.block_until_ready((h_bf, C_bf))
    h_ref_b, C_ref_b = mlstm_cell_reference(
        x, h0, C0_bf16.astype(jnp.float32), params)
    assert C_bf.dtype == jnp.bfloat16, "C_new should keep the streamed dtype"
    assert jnp.allclose(h_bf, h_ref_b, atol=5e-2, rtol=5e-2), "h mismatch (bf16)"
    assert jnp.allclose(C_bf.astype(jnp.float32), C_ref_b,
                        atol=5e-2, rtol=5e-2), "C mismatch (bf16)"

    print("KERNEL_OK")
</pallas_src>

<mosaic_0001>
module attributes {stable_mosaic.version = 11 : i64} {
  func.func @_mlstm_kernel(%arg0: i32, %arg1: memref<2x32xf32, #tpu.memory_space<vmem>>, %arg2: memref<2x32xf32, #tpu.memory_space<vmem>>, %arg3: memref<2x32x32xf32, #tpu.memory_space<vmem>>, %arg4: memref<32x192xf32, #tpu.memory_space<vmem>>, %arg5: memref<1x192xf32, #tpu.memory_space<vmem>>, %arg6: memref<32x96xf32, #tpu.memory_space<vmem>>, %arg7: memref<2x32xf32, #tpu.memory_space<vmem>>, %arg8: memref<2x32x32xf32, #tpu.memory_space<vmem>>) attributes {dimension_semantics = [#tpu.dimension_semantics<parallel>], iteration_bounds = array<i64: 1>, scalar_prefetch = 0 : i64, scratch_operands = 0 : i64, tpu.core_type = #tpu.core_type<tc>, window_params = [{transform_indices = @transform_0, window_bounds = array<i64: 2, 32>}, {transform_indices = @transform_1, window_bounds = array<i64: 2, 32>}, {transform_indices = @transform_2, window_bounds = array<i64: 2, 32, 32>}, {pipeline_mode = #tpu.pipeline_mode<synchronous>, transform_indices = @transform_3, window_bounds = array<i64: 32, 192>}, {pipeline_mode = #tpu.pipeline_mode<synchronous>, transform_indices = @transform_4, window_bounds = array<i64: 1, 192>}, {pipeline_mode = #tpu.pipeline_mode<synchronous>, transform_indices = @transform_5, window_bounds = array<i64: 32, 96>}, {transform_indices = @transform_6, window_bounds = array<i64: 2, 32>}, {transform_indices = @transform_7, window_bounds = array<i64: 2, 32, 32>}]} {
    %c0 = arith.constant 0 : index
    %c0_0 = arith.constant 0 : index
    %0 = vector.load %arg1[%c0, %c0_0] : memref<2x32xf32, #tpu.memory_space<vmem>>, vector<2x32xf32>
    %c0_1 = arith.constant 0 : index
    %c0_2 = arith.constant 0 : index
    %1 = vector.load %arg2[%c0_1, %c0_2] : memref<2x32xf32, #tpu.memory_space<vmem>>, vector<2x32xf32>
    %c0_3 = arith.constant 0 : index
    %c0_4 = arith.constant 0 : index
    %c0_5 = arith.constant 0 : index
    %2 = vector.load %arg3[%c0_3, %c0_4, %c0_5] : memref<2x32x32xf32, #tpu.memory_space<vmem>>, vector<2x32x32xf32>
    %c0_6 = arith.constant 0 : index
    %c0_7 = arith.constant 0 : index
    %3 = vector.load %arg4[%c0_6, %c0_7] : memref<32x192xf32, #tpu.memory_space<vmem>>, vector<32x192xf32>
    %cst = arith.constant dense<0.000000e+00> : vector<2x192xf32>
    %4 = tpu.matmul %0, %3, %cst {dimension_numbers = #tpu.dot_dimension_numbers<[1], [0], [0], [1], [0, 0, 1, 1], [], []>} : vector<2x32xf32>, vector<32x192xf32>, vector<2x192xf32> -> vector<2x192xf32>
    %c0_8 = arith.constant 0 : index
    %c0_9 = arith.constant 0 : index
    %5 = vector.load %arg5[%c0_8, %c0_9] : memref<1x192xf32, #tpu.memory_space<vmem>>, vector<1x192xf32>
    %6 = vector.broadcast %5 : vector<1x192xf32> to vector<2x192xf32>
    %7 = arith.addf %4, %6 : vector<2x192xf32>
    %8 = vector.extract_strided_slice %7 {offsets = [0, 0], sizes = [2, 96], strides = [1, 1]} : vector<2x192xf32> to vector<2x96xf32>
    %c0_10 = arith.constant 0 : index
    %c0_11 = arith.constant 0 : index
    %9 = vector.load %arg6[%c0_10, %c0_11] : memref<32x96xf32, #tpu.memory_space<vmem>>, vector<32x96xf32>
    %cst_12 = arith.constant dense<0.000000e+00> : vector<2x96xf32>
    %10 = tpu.matmul %1, %9, %cst_12 {dimension_numbers = #tpu.dot_dimension_numbers<[1], [0], [0], [1], [0, 0, 1, 1], [], []>} : vector<2x32xf32>, vector<32x96xf32>, vector<2x96xf32> -> vector<2x96xf32>
    %11 = arith.addf %8, %10 : vector<2x96xf32>
    %12 = vector.extract_strided_slice %11 {offsets = [0, 0], sizes = [2, 32], strides = [1, 1]} : vector<2x96xf32> to vector<2x32xf32>
    %13 = math.exp %12 : vector<2x32xf32>
    %14 = vector.extract_strided_slice %11 {offsets = [0, 32], sizes = [2, 32], strides = [1, 1]} : vector<2x96xf32> to vector<2x32xf32>
    %15 = math.exp %14 : vector<2x32xf32>
    %16 = vector.extract_strided_slice %11 {offsets = [0, 64], sizes = [2, 32], strides = [1, 1]} : vector<2x96xf32> to vector<2x32xf32>
    %17 = arith.negf %16 : vector<2x32xf32>
    %18 = math.exp %17 : vector<2x32xf32>
    %cst_13 = arith.constant 1.000000e+00 : f32
    %19 = vector.broadcast %cst_13 : f32 to vector<2x32xf32>
    %20 = arith.addf %19, %18 : vector<2x32xf32>
    %21 = arith.divf %19, %20 : vector<2x32xf32>
    %22 = vector.extract_strided_slice %7 {offsets = [0, 96], sizes = [2, 32], strides = [1, 1]} : vector<2x192xf32> to vector<2x32xf32>
    %23 = vector.extract_strided_slice %7 {offsets = [0, 128], sizes = [2, 32], strides = [1, 1]} : vector<2x192xf32> to vector<2x32xf32>
    %24 = vector.extract_strided_slice %7 {offsets = [0, 160], sizes = [2, 32], strides = [1, 1]} : vector<2x192xf32> to vector<2x32xf32>
    %25 = vector.shape_cast %15 : vector<2x32xf32> to vector<2x32x1xf32>
    %26 = vector.broadcast %25 : vector<2x32x1xf32> to vector<2x32x32xf32>
    %27 = arith.mulf %26, %2 : vector<2x32x32xf32>
    %28 = arith.mulf %13, %24 : vector<2x32xf32>
    %29 = vector.shape_cast %28 : vector<2x32xf32> to vector<2x32x1xf32>
    %30 = vector.shape_cast %23 : vector<2x32xf32> to vector<2x1x32xf32>
    %31 = vector.broadcast %29 : vector<2x32x1xf32> to vector<2x32x32xf32>
    %32 = vector.broadcast %30 : vector<2x1x32xf32> to vector<2x32x32xf32>
    %33 = arith.mulf %31, %32 : vector<2x32x32xf32>
    %34 = arith.addf %27, %33 : vector<2x32x32xf32>
    %c0_14 = arith.constant 0 : index
    %c0_15 = arith.constant 0 : index
    %c0_16 = arith.constant 0 : index
    %35 = vector.load %arg8[%c0_14, %c0_15, %c0_16] : memref<2x32x32xf32, #tpu.memory_space<vmem>>, vector<2x32x32xf32>
    tpu.vector_store %arg8[%c0_14, %c0_15, %c0_16], %34 {strides = array<i32>} : memref<2x32x32xf32, #tpu.memory_space<vmem>>, vector<2x32x32xf32>,
    %36 = vector.shape_cast %22 : vector<2x32xf32> to vector<2x32x1xf32>
    %37 = vector.broadcast %36 : vector<2x32x1xf32> to vector<2x32x32xf32>
    %38 = arith.mulf %37, %27 : vector<2x32x32xf32>
    %cst_17 = arith.constant dense<0.000000e+00> : vector<2x32xf32>
    %39 = vector.multi_reduction <add>, %38, %cst_17 [1] : vector<2x32x32xf32> to vector<2x32xf32>
    %40 = arith.mulf %22, %13 : vector<2x32xf32>
    %41 = arith.mulf %40, %24 : vector<2x32xf32>
    %cst_18 = arith.constant dense<0.000000e+00> : vector<2xf32>
    %42 = vector.multi_reduction <add>, %41, %cst_18 [1] : vector<2x32xf32> to vector<2xf32>
    %43 = vector.shape_cast %42 : vector<2xf32> to vector<2x1xf32>
    %44 = vector.broadcast %43 : vector<2x1xf32> to vector<2x32xf32>
    %45 = arith.mulf %44, %23 : vector<2x32xf32>
    %46 = arith.addf %39, %45 : vector<2x32xf32>
    %47 = arith.mulf %21, %46 : vector<2x32xf32>
    %c0_19 = arith.constant 0 : index
    %c0_20 = arith.constant 0 : index
    %48 = vector.load %arg7[%c0_19, %c0_20] : memref<2x32xf32, #tpu.memory_space<vmem>>, vector<2x32xf32>
    tpu.vector_store %arg7[%c0_19, %c0_20], %47 {strides = array<i32>} : memref<2x32xf32, #tpu.memory_space<vmem>>, vector<2x32xf32>,
    return
  }
  func.func @transform_0(%arg0: i32) -> (i32, i32) {
    %c0_i32 = arith.constant 0 : i32
    %c0_i32_0 = arith.constant 0 : i32
    return %arg0, %c0_i32 : i32, i32
  }
  func.func @transform_1(%arg0: i32) -> (i32, i32) {
    %c0_i32 = arith.constant 0 : i32
    %c0_i32_0 = arith.constant 0 : i32
    return %arg0, %c0_i32 : i32, i32
  }
  func.func @transform_2(%arg0: i32) -> (i32, i32, i32) {
    %c0_i32 = arith.constant 0 : i32
    %c0_i32_0 = arith.constant 0 : i32
    %c0_i32_1 = arith.constant 0 : i32
    return %arg0, %c0_i32, %c0_i32_0 : i32, i32, i32
  }
  func.func @transform_3(%arg0: i32) -> (i32, i32) {
    %c0_i32 = arith.constant 0 : i32
    %c0_i32_0 = arith.constant 0 : i32
    %c0_i32_1 = arith.constant 0 : i32
    return %c0_i32, %c0_i32_0 : i32, i32
  }
  func.func @transform_4(%arg0: i32) -> (i32, i32) {
    %c0_i32 = arith.constant 0 : i32
    %c0_i32_0 = arith.constant 0 : i32
    %c0_i32_1 = arith.constant 0 : i32
    return %c0_i32, %c0_i32_0 : i32, i32
  }
  func.func @transform_5(%arg0: i32) -> (i32, i32) {
    %c0_i32 = arith.constant 0 : i32
    %c0_i32_0 = arith.constant 0 : i32
    %c0_i32_1 = arith.constant 0 : i32
    return %c0_i32, %c0_i32_0 : i32, i32
  }
  func.func @transform_6(%arg0: i32) -> (i32, i32) {
    %c0_i32 = arith.constant 0 : i32
    %c0_i32_0 = arith.constant 0 : i32
    return %arg0, %c0_i32 : i32, i32
  }
  func.func @transform_7(%arg0: i32) -> (i32, i32, i32) {
    %c0_i32 = arith.constant 0 : i32
    %c0_i32_0 = arith.constant 0 : i32
    %c0_i32_1 = arith.constant 0 : i32
    return %arg0, %c0_i32, %c0_i32_0 : i32, i32, i32
  }
}

</mosaic_0001>

<llo_original>
// kernel: tpu_custom_call.1
$region0: #{tpu_custom_call.1}
  #allocation0 [shape = 'u32[]', space=smem, size = 0x4, offset = 0x4, fixed_abs, tag = 'smem constant byte address 0x4 - core index']
  #allocation1 [shape = 'u32[144,128]{1,0:T(1,128)}', space=vmem, size = 0x12000, scoped, tag = 'internal scratch']
  %s0 = inlined_call_operand.vmem [shape: f32[2,32], index: 0, kind: input, shape index: {}]
  %s1 = inlined_call_operand.vmem [shape: f32[2,32], index: 1, kind: input, shape index: {}]
  %s2 = inlined_call_operand.hbm [shape: f32[2,32,32], index: 2, kind: input, shape index: {}, may-alias: {2,7}]
  %s3 = inlined_call_operand.vmem [shape: f32[32,192], index: 3, kind: input, shape index: {}]
  %s4 = inlined_call_operand.vmem [shape: f32[1,192], index: 4, kind: input, shape index: {}]
  %s5 = inlined_call_operand.vmem [shape: f32[32,96], index: 5, kind: input, shape index: {}]
  %s6 = inlined_call_operand.hbm [shape: f32[2,32], index: 6, kind: output, shape index: {0}]
  %s7 = inlined_call_operand.hbm [shape: f32[2,32,32], index: 7, kind: output, shape index: {1}, may-alias: {2,7}]
  %8 = xla_tuple %s6, %s7
  %s9 = sld [smem:[#allocation0]]
  $region46: #{tpu_custom_call.1} parent=0
    _
  %s11 = ssub.s32 1, %s9
  %s12 = scalar_select 0, %s11, %s9
  $region1: #{tpu_custom_call.1} parent=0
    #allocation2 [shape = 'u8[32768]{0}', space=vmem, size = 0x8000, scoped, tag = 'input window, operand 2, single buffered']
    #allocation3 [shape = 's32[1]{0}', space=sflag, size = 0x4, scoped, tag = 'scoped memory for tpu_custom_call.1']
    #allocation4 [shape = 's32[1]{0}', space=sflag, size = 0x4, scoped, tag = 'scoped memory for tpu_custom_call.1']
    #allocation5 [shape = 'u8[1024]{0}', space=vmem, size = 0x400, scoped, tag = 'output window, operand 0, single buffered']
    #allocation6 [shape = 'u8[32768]{0}', space=vmem, size = 0x8000, scoped, tag = 'output window, operand 1, single buffered']
    #allocation7 [shape = 's32[1]{0}', space=sflag, size = 0x4, scoped, tag = 'scoped memory for tpu_custom_call.1']
    %13 = vsyncpa [#allocation3], 0
    %14 = vsyncpa [#allocation4], 0
    %15 = vsyncpa [#allocation7], 0
    // Predicated region
    $region2: #{tpu_custom_call.1} parent=1 // pred_check
      _
    $region3: #{tpu_custom_call.1} parent=1 // pred_check_branch
      %17 = sbr.rel (0) target = $region5
    $region4: #{tpu_custom_call.1} parent=1 // pred_region
      _
    $region5: #{tpu_custom_call.1} parent=1 // pred_fallthru
      _
    // Predicated region
    $region6: #{tpu_custom_call.1} parent=1 // pred_check
      _
    $region7: #{tpu_custom_call.1} parent=1 // pred_check_branch
      %19 = sbr.rel (0) target = $region9
    $region8: #{tpu_custom_call.1} parent=1 // pred_region
      _
    $region9: #{tpu_custom_call.1} parent=1 // pred_fallthru
      _
    // Predicated region
    $region10: #{tpu_custom_call.1} parent=1 // pred_check
      _
    $region11: #{tpu_custom_call.1} parent=1 // pred_check_branch
      %21 = sbr.rel (0) target = $region13
    $region12: #{tpu_custom_call.1} parent=1 // pred_region
      %s23 = ssub.s32 1024, 1024
      %24 = vsyncadd [#allocation3], %s23
      %s25 = sshll.u32 [#allocation2], 4
      %s26 = int_to_ptr.vmem [resolvable:$true] %s25
      %31 = dma.hbm_to_vmem [thread:$0]  %s2, 1024, %s26, [#allocation3], 128, 128, 8
    $region13: #{tpu_custom_call.1} parent=1 // pred_fallthru
      _
    // Predicated region
    $region14: #{tpu_custom_call.1} parent=1 // pred_check
      _
    $region15: #{tpu_custom_call.1} parent=1 // pred_check_branch
      %33 = sbr.rel (0) target = $region17
    $region16: #{tpu_custom_call.1} parent=1 // pred_region
      _
    $region17: #{tpu_custom_call.1} parent=1 // pred_fallthru
      _
    // Predicated region
    $region18: #{tpu_custom_call.1} parent=1 // pred_check
      _
    $region19: #{tpu_custom_call.1} parent=1 // pred_check_branch
      %35 = sbr.rel (0) target = $region21
    $region20: #{tpu_custom_call.1} parent=1 // pred_region
      _
    $region21: #{tpu_custom_call.1} parent=1 // pred_fallthru
      _
    // Predicated region
    $region22: #{tpu_custom_call.1} parent=1 // pred_check
      _
    $region23: #{tpu_custom_call.1} parent=1 // pred_check_branch
      %37 = sbr.rel (0) target = $region25
    $region24: #{tpu_custom_call.1} parent=1 // pred_region
      _
    $region25: #{tpu_custom_call.1} parent=1 // pred_fallthru
      _
    // Predicated region
    $region26: #{tpu_custom_call.1} parent=1 // pred_check
      _
    $region27: #{tpu_custom_call.1} parent=1 // pred_check_branch
      %39 = sbr.rel (0) target = $region29
    $region28: #{tpu_custom_call.1} parent=1 // pred_region
      %40 = dma.done [#allocation3], 1024
    $region29: #{tpu_custom_call.1} parent=1 // pred_fallthru
      _
    %v41 = vld [vmem:[%s0] sm:$0x3]
    %v42 = vld [vmem:[%s1] sm:$0x3]
    %v43 = vld [vmem:[#allocation2] sm:$0xff]
    %v44 = vld [vmem:[#allocation2 + $0x8] sm:$0xff]
    %v45 = vld [vmem:[#allocation2 + $0x10] sm:$0xff]
    %v46 = vld [vmem:[#allocation2 + $0x18] sm:$0xff]
    %v47 = vld [vmem:[#allocation2 + $0x20] sm:$0xff]
    %v48 = vld [vmem:[#allocation2 + $0x28] sm:$0xff]
    %v49 = vld [vmem:[#allocation2 + $0x30] sm:$0xff]
    %v50 = vld [vmem:[#allocation2 + $0x38] sm:$0xff]
    %v51 = vld [vmem:[%s3] sm:$0xff]
    %v52 = vld [vmem:[%s3 + $0x8] sm:$0xff]
    %v53 = vld [vmem:[%s3 + $0x10] sm:$0xff]
    %v54 = vld [vmem:[%s3 + $0x18] sm:$0xff]
    %v55 = vld [vmem:[%s3 + $0x20] sm:$0xff]
    %v56 = vld [vmem:[%s3 + $0x28] sm:$0xff]
    %v57 = vld [vmem:[%s3 + $0x30] sm:$0xff]
    %v58 = vld [vmem:[%s3 + $0x38] sm:$0xff]
    %v59 = vld [vmem:[%s4] sm:$0x3]
    %v61 = vlaneseq
    %v62 = vshrl.u32 %v61, 7
    %v63 = vsub.s32 0, %v62
    %v64 = vrot.slane %v59, %v63
    %v65 = vlaneseq
    %v66 = vshrl.u32 %v65, 7
    %v67 = vsub.s32 1, %v66
    %v68 = vrot.slane %v59, %v67
    %vm71 = vcmask 261120
    %v73 = vsel %vm71, %v41, 0
    %75 = vmatprep.subr.mxu0 0.0
    %76 = vmatpush1.msra.mxu0 0.0
    %77 = vmatprep.subr.mxu0 0.0
    %78 = vmatpush1.msra.mxu0 0.0
    %79 = vmatprep.subr.mxu0 0.0
    %80 = vmatpush1.msra.mxu0 0.0
    %81 = vmatprep.subr.mxu0 0.0
    %82 = vmatpush1.msra.mxu0 0.0
    %83 = vmatprep.subr.mxu0 0.0
    %84 = vmatpush1.msra.mxu0 0.0
    %85 = vmatprep.subr.mxu0 0.0
    %86 = vmatpush1.msra.mxu0 0.0
    %87 = vmatprep.subr.mxu0 0.0
    %88 = vmatpush1.msra.mxu0 0.0
    %89 = vmatprep.subr.mxu0 0.0
    %90 = vmatpush1.msra.mxu0 0.0
    %91 = vmatprep.subr.mxu0 0.0
    %92 = vmatpush1.msra.mxu0 0.0
    %93 = vmatprep.subr.mxu0 0.0
    %94 = vmatpush1.msra.mxu0 0.0
    %95 = vmatprep.subr.mxu0 0.0
    %96 = vmatpush1.msra.mxu0 0.0
    %97 = vmatprep.subr.mxu0 0.0
    %98 = vmatpush1.msra.mxu0 0.0
    %99 = vmatprep.subr.mxu0 %v58
    %100 = vmatpush1.msra.mxu0 %v57
    %101 = vmatprep.subr.mxu0 %v56
    %102 = vmatpush1.msra.mxu0 %v55
    %103 = vmatprep.subr.mxu0 %v54
    %104 = vmatpush1.msra.mxu0 %v53
    %105 = vmatprep.subr.mxu0 %v52
    %106 = vmatpush1.msra.mxu0 %v51
    %107 = vmatprep.subr.mxu0 0.0
    %108 = vmatpush2.msra.mxu0 0.0
    %109 = vmatprep.subr.mxu0 0.0
    %110 = vmatpush2.msra.mxu0 0.0
    %111 = vmatprep.subr.mxu0 0.0
    %112 = vmatpush2.msra.mxu0 0.0
    %113 = vmatprep.subr.mxu0 0.0
    %114 = vmatpush2.msra.mxu0 0.0
    %115 = vmatprep.subr.mxu0 0.0
    %116 = vmatpush2.msra.mxu0 0.0
    %117 = vmatprep.subr.mxu0 0.0
    %118 = vmatpush2.msra.mxu0 0.0
    %119 = vmatprep.subr.mxu0 0.0
    %120 = vmatpush2.msra.mxu0 0.0
    %121 = vmatprep.subr.mxu0 0.0
    %122 = vmatpush2.msra.mxu0 0.0
    %123 = vmatprep.subr.mxu0 0.0
    %124 = vmatpush2.msra.mxu0 0.0
    %125 = vmatprep.subr.mxu0 0.0
    %126 = vmatpush2.msra.mxu0 0.0
    %127 = vmatprep.subr.mxu0 0.0
    %128 = vmatpush2.msra.mxu0 0.0
    %129 = vmatprep.subr.mxu0 0.0
    %130 = vmatpush2.msra.mxu0 0.0
    %131 = vmatprep.subr.mxu0 0.0
    %132 = vmatpush2.msra.mxu0 0.0
    %133 = vmatprep.subr.mxu0 0.0
    %134 = vmatpush2.msra.mxu0 0.0
    %135 = vmatprep.subr.mxu0 0.0
    %136 = vmatpush2.msra.mxu0 0.0
    %137 = vmatprep.subr.mxu0 0.0
    %138 = vmatpush2.msra.mxu0 0.0
    %139 = vmatprep.mubr.f32.mxu0 0.0
    %140 = vmatmul.mubr.f32.gmra.mxu0 %v73
    %v141 = vpop.f32.mrf.mxu0
    %v142 = vadd.f32 %v64, %v141
    %v143 = vpop.f32.mrf.mxu0
    %v144 = vadd.f32 %v68, %v143
    %145 = vdwg.mxu0
    %v146 = vld [vmem:[%s5] sm:$0xff]
    %v147 = vld [vmem:[%s5 + $0x8] sm:$0xff]
    %v148 = vld [vmem:[%s5 + $0x10] sm:$0xff]
    %v149 = vld [vmem:[%s5 + $0x18] sm:$0xff]
    %v151 = vsel %vm71, %v42, 0
    %153 = vmatprep.subr.mxu0 0.0
    %154 = vmatpush1.msra.mxu0 0.0
    %155 = vmatprep.subr.mxu0 0.0
    %156 = vmatpush1.msra.mxu0 0.0
    %157 = vmatprep.subr.mxu0 0.0
    %158 = vmatpush1.msra.mxu0 0.0
    %159 = vmatprep.subr.mxu0 0.0
    %160 = vmatpush1.msra.mxu0 0.0
    %161 = vmatprep.subr.mxu0 0.0
    %162 = vmatpush1.msra.mxu0 0.0
    %163 = vmatprep.subr.mxu0 0.0
    %164 = vmatpush1.msra.mxu0 0.0
    %165 = vmatprep.subr.mxu0 0.0
    %166 = vmatpush1.msra.mxu0 0.0
    %167 = vmatprep.subr.mxu0 0.0
    %168 = vmatpush1.msra.mxu0 0.0
    %169 = vmatprep.subr.mxu0 0.0
    %170 = vmatpush1.msra.mxu0 0.0
    %171 = vmatprep.subr.mxu0 0.0
    %172 = vmatpush1.msra.mxu0 0.0
    %173 = vmatprep.subr.mxu0 0.0
    %174 = vmatpush1.msra.mxu0 0.0
    %175 = vmatprep.subr.mxu0 0.0
    %176 = vmatpush1.msra.mxu0 0.0
    %177 = vmatprep.subr.mxu0 0.0
    %178 = vmatpush1.msra.mxu0 %v149
    %179 = vmatprep.subr.mxu0 0.0
    %180 = vmatpush1.msra.mxu0 %v148
    %181 = vmatprep.subr.mxu0 0.0
    %182 = vmatpush1.msra.mxu0 %v147
    %183 = vmatprep.subr.mxu0 0.0
    %184 = vmatpush1.msra.mxu0 %v146
    %185 = vmatprep.subr.mxu0 0.0
    %186 = vmatpush2.msra.mxu0 0.0
    %187 = vmatprep.subr.mxu0 0.0
    %188 = vmatpush2.msra.mxu0 0.0
    %189 = vmatprep.subr.mxu0 0.0
    %190 = vmatpush2.msra.mxu0 0.0
    %191 = vmatprep.subr.mxu0 0.0
    %192 = vmatpush2.msra.mxu0 0.0
    %193 = vmatprep.subr.mxu0 0.0
    %194 = vmatpush2.msra.mxu0 0.0
    %195 = vmatprep.subr.mxu0 0.0
    %196 = vmatpush2.msra.mxu0 0.0
    %197 = vmatprep.subr.mxu0 0.0
    %198 = vmatpush2.msra.mxu0 0.0
    %199 = vmatprep.subr.mxu0 0.0
    %200 = vmatpush2.msra.mxu0 0.0
    %201 = vmatprep.subr.mxu0 0.0
    %202 = vmatpush2.msra.mxu0 0.0
    %203 = vmatprep.subr.mxu0 0.0
    %204 = vmatpush2.msra.mxu0 0.0
    %205 = vmatprep.subr.mxu0 0.0
    %206 = vmatpush2.msra.mxu0 0.0
    %207 = vmatprep.subr.mxu0 0.0
    %208 = vmatpush2.msra.mxu0 0.0
    %209 = vmatprep.subr.mxu0 0.0
    %210 = vmatpush2.msra.mxu0 0.0
    %211 = vmatprep.subr.mxu0 0.0
    %212 = vmatpush2.msra.mxu0 0.0
    %213 = vmatprep.subr.mxu0 0.0
    %214 = vmatpush2.msra.mxu0 0.0
    %215 = vmatprep.subr.mxu0 0.0
    %216 = vmatpush2.msra.mxu0 0.0
    %217 = vmatprep.mubr.f32.mxu0 0.0
    %218 = vmatmul.mubr.f32.gmra.mxu0 %v151
    %v219 = vpop.f32.mrf.mxu0
    %v220 = vadd.f32 0.0, %v219
    %v221 = vpop.f32.mrf.mxu0
    %222 = vdwg.mxu0
    %v223 = vadd.f32 %v142, %v220
    %v224 = vmul.f32 %v223, 1.442695
    %v225 = vpow.pop %v224
    %v226 = vxor.u32 %v223, 2147483648
    %v227 = vmul.f32 %v226, 1.442695
    %v228 = vpow.pop %v227
    %v229 = vadd.f32 %v228, 1.0
    %v230 = vrcp.pop %v229
    %v231 = vmul.f32 1.0, %v230
    %v232 = vlaneseq
    %v233 = vshrl.u32 %v232, 7
    %v234 = vsub.s32 0, %v233
    %v235 = vrot.slane %v225, %v234
    %s237 = sor.u32 256, 32
    %238 = vbcast.lane.b32.xlu0 %v235, %s237
    %v239 = vpop.permute.xlu0 %238
    %s241 = sor.u32 256, 40
    %242 = vbcast.lane.b32.xlu0 %v235, %s241
    %v243 = vpop.permute.xlu0 %242
    %s245 = sor.u32 256, 48
    %246 = vbcast.lane.b32.xlu0 %v235, %s245
    %v247 = vpop.permute.xlu0 %246
    %s249 = sor.u32 256, 56
    %250 = vbcast.lane.b32.xlu0 %v235, %s249
    %v251 = vpop.permute.xlu0 %250
    %v252 = vlaneseq
    %v253 = vshrl.u32 %v252, 7
    %v254 = vsub.s32 1, %v253
    %v255 = vrot.slane %v225, %v254
    %s257 = sor.u32 256, 32
    %258 = vbcast.lane.b32.xlu0 %v255, %s257
    %v259 = vpop.permute.xlu0 %258
    %s261 = sor.u32 256, 40
    %262 = vbcast.lane.b32.xlu0 %v255, %s261
    %v263 = vpop.permute.xlu0 %262
    %s265 = sor.u32 256, 48
    %266 = vbcast.lane.b32.xlu0 %v255, %s265
    %v267 = vpop.permute.xlu0 %266
    %s269 = sor.u32 256, 56
    %270 = vbcast.lane.b32.xlu0 %v255, %s269
    %v271 = vpop.permute.xlu0 %270
    %v272 = vmul.f32 %v239, %v43
    %v273 = vmul.f32 %v243, %v44
    %v274 = vmul.f32 %v247, %v45
    %v275 = vmul.f32 %v251, %v46
    %v276 = vmul.f32 %v259, %v47
    %v277 = vmul.f32 %v263, %v48
    %v278 = vmul.f32 %v267, %v49
    %v279 = vmul.f32 %v271, %v50
    %281 = vrot.lane.b32.xlu0 %v144, 96
    %v282 = vpop.permute.xlu0 %281
    %v284 = vmul.f32 %v225, %v282
    %v285 = vlaneseq
    %v286 = vshrl.u32 %v285, 7
    %v287 = vsub.s32 0, %v286
    %v288 = vrot.slane %v284, %v287
    %290 = vbcast.lane.b32.xlu0 %v288, 256
    %v291 = vpop.permute.xlu0 %290
    %s293 = sor.u32 256, 8
    %294 = vbcast.lane.b32.xlu0 %v288, %s293
    %v295 = vpop.permute.xlu0 %294
    %s297 = sor.u32 256, 16
    %298 = vbcast.lane.b32.xlu0 %v288, %s297
    %v299 = vpop.permute.xlu0 %298
    %s301 = sor.u32 256, 24
    %302 = vbcast.lane.b32.xlu0 %v288, %s301
    %v303 = vpop.permute.xlu0 %302
    %v304 = vlaneseq
    %v305 = vshrl.u32 %v304, 7
    %v306 = vsub.s32 1, %v305
    %v307 = vrot.slane %v284, %v306
    %309 = vbcast.lane.b32.xlu0 %v307, 256
    %v310 = vpop.permute.xlu0 %309
    %s312 = sor.u32 256, 8
    %313 = vbcast.lane.b32.xlu0 %v307, %s312
    %v314 = vpop.permute.xlu0 %313
    %s316 = sor.u32 256, 16
    %317 = vbcast.lane.b32.xlu0 %v307, %s316
    %v318 = vpop.permute.xlu0 %317
    %s320 = sor.u32 256, 24
    %321 = vbcast.lane.b32.xlu0 %v307, %s320
    %v322 = vpop.permute.xlu0 %321
    %v324 = vunpack.c.l.s4 1966171168
    %v325 = vunpack.c.0.s8 %v324
    %v326 = vlaneseq
    %v327 = vshrl.u32 %v326, 7
    %v328 = vsub.s32 %v325, %v327
    %v329 = vrot.slane %v144, %v328
    %v330 = vcombine.high %v329, %v329
    %v332 = vunpack.c.l.s4 1966171168
    %v333 = vunpack.c.0.s8 %v332
    %v334 = vlaneseq
    %v335 = vshrl.u32 %v334, 7
    %v336 = vsub.s32 %v333, %v335
    %v337 = vrot.slane %v329, %v336
    %v339 = vunpack.c.l.s4 1966171168
    %v340 = vunpack.c.0.s8 %v339
    %v341 = vlaneseq
    %v342 = vshrl.u32 %v341, 7
    %v343 = vsub.s32 %v340, %v342
    %v344 = vrot.slane %v330, %v343
    %v345 = vlaneseq
    %v346 = vshrl.u32 %v345, 7
    %v347 = vsub.s32 0, %v346
    %v348 = vrot.slane %v337, %v347
    %v349 = vlaneseq
    %v350 = vshrl.u32 %v349, 7
    %v351 = vsub.s32 0, %v350
    %v352 = vrot.slane %v344, %v351
    %v355 = vmul.f32 %v291, %v348
    %v356 = vmul.f32 %v295, %v348
    %v357 = vmul.f32 %v299, %v348
    %v358 = vmul.f32 %v303, %v348
    %v359 = vmul.f32 %v310, %v352
    %v360 = vmul.f32 %v314, %v352
    %v361 = vmul.f32 %v318, %v352
    %v362 = vmul.f32 %v322, %v352
    %v363 = vadd.f32 %v272, %v355
    %v364 = vadd.f32 %v273, %v356
    %v365 = vadd.f32 %v274, %v357
    %v366 = vadd.f32 %v275, %v358
    %v367 = vadd.f32 %v276, %v359
    %v368 = vadd.f32 %v277, %v360
    %v369 = vadd.f32 %v278, %v361
    %v370 = vadd.f32 %v279, %v362
    %371 = vst.msk [vmem:[#allocation6] sm:$0xff] %vm71, %v363
    %372 = vst.msk [vmem:[#allocation6 + $0x8] sm:$0xff] %vm71, %v364
    %373 = vst.msk [vmem:[#allocation6 + $0x10] sm:$0xff] %vm71, %v365
    %374 = vst.msk [vmem:[#allocation6 + $0x18] sm:$0xff] %vm71, %v366
    %375 = vst.msk [vmem:[#allocation6 + $0x20] sm:$0xff] %vm71, %v367
    %376 = vst.msk [vmem:[#allocation6 + $0x28] sm:$0xff] %vm71, %v368
    %377 = vst.msk [vmem:[#allocation6 + $0x30] sm:$0xff] %vm71, %v369
    %378 = vst.msk [vmem:[#allocation6 + $0x38] sm:$0xff] %vm71, %v370
    %v379 = vlaneseq
    %v380 = vshrl.u32 %v379, 7
    %v381 = vsub.s32 0, %v380
    %v382 = vrot.slane %v142, %v381
    %s384 = sor.u32 256, 96
    %385 = vbcast.lane.b32.xlu0 %v382, %s384
    %v386 = vpop.permute.xlu0 %385
    %s388 = sor.u32 256, 104
    %389 = vbcast.lane.b32.xlu0 %v382, %s388
    %v390 = vpop.permute.xlu0 %389
    %s392 = sor.u32 256, 112
    %393 = vbcast.lane.b32.xlu0 %v382, %s392
    %v394 = vpop.permute.xlu0 %393
    %s396 = sor.u32 256, 120
    %397 = vbcast.lane.b32.xlu0 %v382, %s396
    %v398 = vpop.permute.xlu0 %397
    %v399 = vlaneseq
    %v400 = vshrl.u32 %v399, 7
    %v401 = vsub.s32 1, %v400
    %v402 = vrot.slane %v142, %v401
    %s404 = sor.u32 256, 96
    %405 = vbcast.lane.b32.xlu0 %v402, %s404
    %v406 = vpop.permute.xlu0 %405
    %s408 = sor.u32 256, 104
    %409 = vbcast.lane.b32.xlu0 %v402, %s408
    %v410 = vpop.permute.xlu0 %409
    %s412 = sor.u32 256, 112
    %413 = vbcast.lane.b32.xlu0 %v402, %s412
    %v414 = vpop.permute.xlu0 %413
    %s416 = sor.u32 256, 120
    %417 = vbcast.lane.b32.xlu0 %v402, %s416
    %v418 = vpop.permute.xlu0 %417
    %v419 = vmul.f32 %v386, %v272
    %v420 = vmul.f32 %v390, %v273
    %v421 = vmul.f32 %v394, %v274
    %v422 = vmul.f32 %v398, %v275
    %v423 = vmul.f32 %v406, %v276
    %v424 = vmul.f32 %v410, %v277
    %v425 = vmul.f32 %v414, %v278
    %v426 = vmul.f32 %v418, %v279
    %v427 = vsel %vm71, %v419, 0.0
    %v428 = vsel %vm71, %v420, 0.0
    %v429 = vadd.f32 %v427, %v428
    %v430 = vsel %vm71, %v421, 0.0
    %v431 = vadd.f32 %v429, %v430
    %v432 = vsel %vm71, %v422, 0.0
    %v433 = vadd.f32 %v431, %v432
    %v434 = vrot.slane %v433, 4
    %v435 = vadd.f32 %v433, %v434
    %v436 = vrot.slane %v435, 2
    %v437 = vadd.f32 %v435, %v436
    %v438 = vrot.slane %v437, 1
    %v439 = vadd.f32 %v437, %v438
    %v440 = vsel %vm71, %v423, 0.0
    %v441 = vsel %vm71, %v424, 0.0
    %v442 = vadd.f32 %v440, %v441
    %v443 = vsel %vm71, %v425, 0.0
    %v444 = vadd.f32 %v442, %v443
    %v445 = vsel %vm71, %v426, 0.0
    %v446 = vadd.f32 %v444, %v445
    %v447 = vrot.slane %v446, 4
    %v448 = vadd.f32 %v446, %v447
    %v449 = vrot.slane %v448, 2
    %v450 = vadd.f32 %v448, %v449
    %v451 = vrot.slane %v450, 1
    %v452 = vadd.f32 %v450, %v451
    %454 = vrot.lane.b32.xlu0 %v225, 96
    %v455 = vpop.permute.xlu0 %454
    %v457 = vmul.f32 %v142, %v455
    %458 = vrot.lane.b32.xlu0 %v144, 64
    %v459 = vpop.permute.xlu0 %458
    %v461 = vmul.f32 %v457, %v459
    %463 = vrot.lane.b32.xlu0 %v461, 32
    %v464 = vpop.permute.xlu0 %463
    %vm466 = vcmask 254976
    %v467 = vsel %vm466, %v464, 0.0
    %468 = vadd.xlane.f32.xlu0 %v467
    %v469 = vpop.xlane.xlu0 %468
    %v470 = vmul.f32 %v469, %v144
    %v472 = vrot.slane %v470, 1
    %v475 = vadd.f32 %v439, %v470
    %v476 = vadd.f32 %v452, %v472
    %v479 = vrot.slane %v476, 7
    %vm480 = vcmask 1041409
    %v481 = vsel %vm480, %v479, %v475
    %482 = vrot.lane.b32.xlu0 %v481, 64
    %v483 = vpop.permute.xlu0 %482
    %v485 = vmul.f32 %v231, %v483
    %487 = vrot.lane.b32.xlu0 %v485, 64
    %v488 = vpop.permute.xlu0 %487
    %490 = vst.msk [vmem:[#allocation5] sm:$0x3] %vm466, %v488
    // Predicated region
    $region30: #{tpu_custom_call.1} parent=1 // pred_check
      _
    $region31: #{tpu_custom_call.1} parent=1 // pred_check_branch
      %492 = sbr.rel (0) target = $region33
    $region32: #{tpu_custom_call.1} parent=1 // pred_region
      %s494 = ssub.s32 32, 32
      %495 = vsyncadd [#allocation4], %s494
      %s497 = sshll.u32 [#allocation5], 4
      %s498 = int_to_ptr.vmem [resolvable:$true] %s497
      %500 = dma.vmem_to_hbm [thread:$0]  %s498, 32, %s6, [#allocation4]
    $region33: #{tpu_custom_call.1} parent=1 // pred_fallthru
      _
    // Predicated region
    $region34: #{tpu_custom_call.1} parent=1 // pred_check
      _
    $region35: #{tpu_custom_call.1} parent=1 // pred_check_branch
      %502 = sbr.rel (0) target = $region37
    $region36: #{tpu_custom_call.1} parent=1 // pred_region
      %s504 = ssub.s32 1024, 1024
      %505 = vsyncadd [#allocation7], %s504
      %s506 = sshll.u32 [#allocation6], 4
      %s507 = int_to_ptr.vmem [resolvable:$true] %s506
      %512 = dma.vmem_to_hbm [thread:$0]  %s507, 1024, %s7, [#allocation7], 128, 128, 8
    $region37: #{tpu_custom_call.1} parent=1 // pred_fallthru
      _
    // Predicated region
    $region38: #{tpu_custom_call.1} parent=1 // pred_check
      _
    $region39: #{tpu_custom_call.1} parent=1 // pred_check_branch
      %514 = sbr.rel (0) target = $region41
    $region40: #{tpu_custom_call.1} parent=1 // pred_region
      %515 = dma.done [#allocation4], 32
    $region41: #{tpu_custom_call.1} parent=1 // pred_fallthru
      _
    // Predicated region
    $region42: #{tpu_custom_call.1} parent=1 // pred_check
      _
    $region43: #{tpu_custom_call.1} parent=1 // pred_check_branch
      %517 = sbr.rel (0) target = $region45
    $region44: #{tpu_custom_call.1} parent=1 // pred_region
      %518 = dma.done [#allocation7], 1024
    $region45: #{tpu_custom_call.1} parent=1 // pred_fallthru
      _
    %519 = vsyncpa [#allocation3], 1
    %520 = vsyncpa [#allocation4], 1
    %521 = vsyncpa [#allocation7], 1

</llo_original>
